<compile_context>
chip_gen: v7x
topology: tpu7x:2x2x1
jax: 0.10.0
libtpu: 0.0.40
codegen_flags: <defaults>
</compile_context>

<pallas_src>
import functools

import jax
import jax.numpy as jnp
from jax.experimental import pallas as pl
from jax.experimental.pallas import tpu as pltpu

T_TEMP = 0.07
INV_T = 1.0 / T_TEMP
EPS = 1e-12            # torch F.normalize default eps (clamps the L2 norm)
EPS2 = EPS * EPS       # same clamp expressed on the squared norm (for rsqrt)


def _l2n(x):
    """L2-normalize along the last axis; rsqrt lowers to the EUP (cheap)."""
    ssq = jnp.sum(x * x, axis=-1, keepdims=True)
    return x * jax.lax.rsqrt(jnp.maximum(ssq, EPS2))


def snico_kernel(na_ref, pa_ref, pb_ref, nb_ref, loss_ref, *, inv_batch):
    step = pl.program_id(0)

    # Zero the resident (1, 1) accumulator on the first grid step.
    @pl.when(step == 0)
    def _():
        loss_ref[...] = jnp.zeros_like(loss_ref)

    na = na_ref[...]          # (TB, S, C)
    pa = pa_ref[...]
    pb = pb_ref[...]
    nb = nb_ref[...]

    # ---- Fuse the two NCE branches along the batch axis (R = 2*TB rows) ----
    #   rows [0, TB)    -> HA: q = mean(NA, 1), k = mean(PA, 1), neg = PB
    #   rows [TB, 2*TB) -> HB: q = mean(NB, 1), k = mean(PB, 1), neg = PA
    # All concats are along the (untiled) major axis of rank-3 tensors.
    q_src = jnp.concatenate([na, nb], axis=0)    # (R, S, C)
    k_src = jnp.concatenate([pa, pb], axis=0)    # (R, S, C)
    neg = jnp.concatenate([pb, pa], axis=0)      # (R, S, C)

    inv_seq = 1.0 / q_src.shape[1]
    # torch.mean(x, 1), kept with a singleton "query" axis -> (R, 1, C), fp32.
    q = jnp.sum(q_src, axis=1, keepdims=True).astype(jnp.float32) * inv_seq
    k = jnp.sum(k_src, axis=1, keepdims=True).astype(jnp.float32) * inv_seq

    qn = _l2n(q)                                  # (R, 1, C)
    kn = _l2n(k)                                  # (R, 1, C)

    # Positive logits: (R, 1, 1).
    l_pos = jnp.sum(qn * kn, axis=2, keepdims=True) * INV_T

    # Negative logits on the MXU: (R, 1, C) x (R, S, C) -> (R, 1, S).
    # Feed `neg` in its native dtype (bf16 goes straight to the MXU on v5e);
    # accumulate in f32.
    l_neg_raw = jnp.einsum('rqc,rkc->rqk', qn.astype(neg.dtype), neg,
                           preferred_element_type=jnp.float32)

    # Normalize the negatives by scaling the logits with the per-negative
    # inverse L2 norm, instead of materializing a normalized (R, S, C) tensor.
    neg_sq = jnp.sum(neg * neg, axis=2)[:, None, :].astype(jnp.float32)
    l_neg = l_neg_raw * jax.lax.rsqrt(jnp.maximum(neg_sq, EPS2)) * INV_T

    # Cross entropy with target class 0 over logits = [l_pos, l_neg]:
    #   loss_r = logsumexp([l_pos_r, l_neg_r,:]) - l_pos_r
    m = jnp.maximum(l_pos, jnp.max(l_neg, axis=2, keepdims=True))      # (R,1,1)
    sumexp = jnp.exp(l_pos - m) + jnp.sum(jnp.exp(l_neg - m), axis=2,
                                          keepdims=True)               # (R,1,1)
    per_row = m + jnp.log(sumexp) - l_pos                              # (R,1,1)

    # Accumulate per-row sums; HA + HB = (sum over all 2B rows) / B.
    loss_ref[...] += jnp.sum(per_row, axis=0)                          # (1,1)

    @pl.when(step == pl.num_programs(0) - 1)
    def _():
        loss_ref[...] = loss_ref[...] * inv_batch


def _pick_batch_tile(batch, max_tile=8):
    """Largest divisor of `batch` that is <= max_tile."""
    tile = min(batch, max_tile)
    while batch % tile:
        tile -= 1
    return tile


def snico_loss(na, pa, pb, nb, *, batch_tile=None):
    """HA_refinement + HB_refinement for (B, S, C) inputs NA, PA, PB, NB."""
    batch, seq, chan = na.shape
    if batch_tile is None:
        # Tile: big enough to amortize ~0.35us/step pipeline overhead, small
        # enough that 4 double-buffered (TB, S, C) inputs stay well inside
        # VMEM (v7x: 64 MiB physical / 32 MiB default scoped).
        batch_tile = _pick_batch_tile(batch)
    grid = (batch // batch_tile,)

    kernel = functools.partial(snico_kernel, inv_batch=1.0 / batch)
    in_spec = pl.BlockSpec((batch_tile, seq, chan), lambda i: (i, 0, 0))

    out = pl.pallas_call(
        kernel,
        out_shape=jax.ShapeDtypeStruct((1, 1), jnp.float32),
        grid_spec=pltpu.PrefetchScalarGridSpec(
            num_scalar_prefetch=0,
            grid=grid,
            in_specs=[in_spec, in_spec, in_spec, in_spec],
            out_specs=pl.BlockSpec((1, 1), lambda i: (0, 0)),
        ),
        compiler_params=pltpu.CompilerParams(
            # The grid axis reduces into a single resident (1,1) accumulator,
            # so it must be sequential ("arbitrary"); exploiting v7x megacore
            # would require per-core partial sums combined outside the kernel.
            dimension_semantics=("arbitrary",),
        ),
    )(na, pa, pb, nb)
    return out[0, 0]


def snico_loss_ref(na, pa, pb, nb):
    """Pure-JAX reference of the PyTorch forward, for verification."""
    def nce(q, k, neg):
        qn = q / jnp.maximum(jnp.linalg.norm(q, axis=1, keepdims=True), EPS)
        kn = k / jnp.maximum(jnp.linalg.norm(k, axis=1, keepdims=True), EPS)
        negn = neg / jnp.maximum(
            jnp.linalg.norm(neg, axis=2, keepdims=True), EPS)
        l_pos = jnp.einsum('nc,nc->n', qn, kn)[:, None]
        l_neg = jnp.einsum('nc,nsc->ns', qn, negn)
        logits = jnp.concatenate([l_pos, l_neg], axis=1) / T_TEMP
        lse = jax.scipy.special.logsumexp(logits, axis=1)
        return jnp.mean(lse - logits[:, 0])
    ha = nce(jnp.mean(na, 1), jnp.mean(pa, 1), pb)
    hb = nce(jnp.mean(nb, 1), jnp.mean(pb, 1), pa)
    return ha + hb


if __name__ == "__main__":
    B, S, C = 2, 8, 32   # batch, sequence (negatives per sample), channels
    key = jax.random.PRNGKey(0)
    k1, k2, k3, k4 = jax.random.split(key, 4)
    na = jax.random.normal(k1, (B, S, C), dtype=jnp.float32)
    pa = jax.random.normal(k2, (B, S, C), dtype=jnp.float32)
    pb = jax.random.normal(k3, (B, S, C), dtype=jnp.float32)
    nb = jax.random.normal(k4, (B, S, C), dtype=jnp.float32)

    loss = jax.block_until_ready(snico_loss(na, pa, pb, nb))
    ref = jax.block_until_ready(snico_loss_ref(na, pa, pb, nb))

    # Slightly looser than before: the kernel now uses the MXU path for the
    # negative logits and rsqrt-based normalization, so rounding differs
    # marginally from the XLA reference path.
    assert jnp.allclose(loss, ref, rtol=1e-4, atol=1e-4), (loss, ref)
    print("KERNEL_OK")
</pallas_src>

<mosaic_0001>
module attributes {stable_mosaic.version = 11 : i64} {
  func.func @snico_kernel(%arg0: i32, %arg1: memref<2x8x32xf32, #tpu.memory_space<vmem>>, %arg2: memref<2x8x32xf32, #tpu.memory_space<vmem>>, %arg3: memref<2x8x32xf32, #tpu.memory_space<vmem>>, %arg4: memref<2x8x32xf32, #tpu.memory_space<vmem>>, %arg5: memref<1x1xf32, #tpu.memory_space<vmem>>) attributes {dimension_semantics = [#tpu.dimension_semantics<arbitrary>], iteration_bounds = array<i64: 1>, scalar_prefetch = 0 : i64, scratch_operands = 0 : i64, tpu.core_type = #tpu.core_type<tc>, window_params = [{transform_indices = @transform_0, window_bounds = array<i64: 2, 8, 32>}, {transform_indices = @transform_1, window_bounds = array<i64: 2, 8, 32>}, {transform_indices = @transform_2, window_bounds = array<i64: 2, 8, 32>}, {transform_indices = @transform_3, window_bounds = array<i64: 2, 8, 32>}, {pipeline_mode = #tpu.pipeline_mode<synchronous>, transform_indices = @transform_4, window_bounds = array<i64: 1, 1>}]} {
    %c0_i32 = arith.constant 0 : i32
    %0 = arith.cmpi eq, %arg0, %c0_i32 : i32
    %1 = arith.extui %0 : i1 to i32
    %c0_i32_0 = arith.constant 0 : i32
    %2 = arith.cmpi ne, %1, %c0_i32_0 : i32
    scf.if %2 {
      %cst_34 = arith.constant 0.000000e+00 : f32
      %70 = vector.broadcast %cst_34 : f32 to vector<1x1xf32>
      %c0_35 = arith.constant 0 : index
      %c0_36 = arith.constant 0 : index
      %71 = vector.load %arg5[%c0_35, %c0_36] : memref<1x1xf32, #tpu.memory_space<vmem>>, vector<1x1xf32>
      tpu.vector_store %arg5[%c0_35, %c0_36], %70 {strides = array<i32>} : memref<1x1xf32, #tpu.memory_space<vmem>>, vector<1x1xf32>,
    } else {
    }
    %c0 = arith.constant 0 : index
    %c0_1 = arith.constant 0 : index
    %c0_2 = arith.constant 0 : index
    %3 = vector.load %arg1[%c0, %c0_1, %c0_2] : memref<2x8x32xf32, #tpu.memory_space<vmem>>, vector<2x8x32xf32>
    %c0_3 = arith.constant 0 : index
    %c0_4 = arith.constant 0 : index
    %c0_5 = arith.constant 0 : index
    %4 = vector.load %arg2[%c0_3, %c0_4, %c0_5] : memref<2x8x32xf32, #tpu.memory_space<vmem>>, vector<2x8x32xf32>
    %c0_6 = arith.constant 0 : index
    %c0_7 = arith.constant 0 : index
    %c0_8 = arith.constant 0 : index
    %5 = vector.load %arg3[%c0_6, %c0_7, %c0_8] : memref<2x8x32xf32, #tpu.memory_space<vmem>>, vector<2x8x32xf32>
    %c0_9 = arith.constant 0 : index
    %c0_10 = arith.constant 0 : index
    %c0_11 = arith.constant 0 : index
    %6 = vector.load %arg4[%c0_9, %c0_10, %c0_11] : memref<2x8x32xf32, #tpu.memory_space<vmem>>, vector<2x8x32xf32>
    %7 = tpu.concatenate %3, %6 in 0 : vector<2x8x32xf32>, vector<2x8x32xf32> -> vector<4x8x32xf32>
    %8 = tpu.concatenate %4, %5 in 0 : vector<2x8x32xf32>, vector<2x8x32xf32> -> vector<4x8x32xf32>
    %9 = tpu.concatenate %5, %4 in 0 : vector<2x8x32xf32>, vector<2x8x32xf32> -> vector<4x8x32xf32>
    %cst = arith.constant dense<0.000000e+00> : vector<4x32xf32>
    %10 = vector.multi_reduction <add>, %7, %cst [1] : vector<4x8x32xf32> to vector<4x32xf32>
    %11 = vector.shape_cast %10 : vector<4x32xf32> to vector<4x1x32xf32>
    %cst_12 = arith.constant 1.250000e-01 : f32
    %12 = vector.broadcast %cst_12 : f32 to vector<4x1x32xf32>
    %13 = arith.mulf %11, %12 : vector<4x1x32xf32>
    %cst_13 = arith.constant dense<0.000000e+00> : vector<4x32xf32>
    %14 = vector.multi_reduction <add>, %8, %cst_13 [1] : vector<4x8x32xf32> to vector<4x32xf32>
    %15 = vector.shape_cast %14 : vector<4x32xf32> to vector<4x1x32xf32>
    %cst_14 = arith.constant 1.250000e-01 : f32
    %16 = vector.broadcast %cst_14 : f32 to vector<4x1x32xf32>
    %17 = arith.mulf %15, %16 : vector<4x1x32xf32>
    %18 = arith.mulf %13, %13 : vector<4x1x32xf32>
    %cst_15 = arith.constant dense<0.000000e+00> : vector<4x1xf32>
    %19 = vector.multi_reduction <add>, %18, %cst_15 [2] : vector<4x1x32xf32> to vector<4x1xf32>
    %20 = vector.shape_cast %19 : vector<4x1xf32> to vector<4x1x1xf32>
    %cst_16 = arith.constant 1.000000e-24 : f32
    %21 = vector.broadcast %cst_16 : f32 to vector<4x1x1xf32>
    %22 = arith.maximumf %20, %21 : vector<4x1x1xf32>
    %23 = math.rsqrt %22 : vector<4x1x1xf32>
    %24 = vector.broadcast %23 : vector<4x1x1xf32> to vector<4x1x32xf32>
    %25 = arith.mulf %13, %24 : vector<4x1x32xf32>
    %26 = arith.mulf %17, %17 : vector<4x1x32xf32>
    %cst_17 = arith.constant dense<0.000000e+00> : vector<4x1xf32>
    %27 = vector.multi_reduction <add>, %26, %cst_17 [2] : vector<4x1x32xf32> to vector<4x1xf32>
    %28 = vector.shape_cast %27 : vector<4x1xf32> to vector<4x1x1xf32>
    %cst_18 = arith.constant 1.000000e-24 : f32
    %29 = vector.broadcast %cst_18 : f32 to vector<4x1x1xf32>
    %30 = arith.maximumf %28, %29 : vector<4x1x1xf32>
    %31 = math.rsqrt %30 : vector<4x1x1xf32>
    %32 = vector.broadcast %31 : vector<4x1x1xf32> to vector<4x1x32xf32>
    %33 = arith.mulf %17, %32 : vector<4x1x32xf32>
    %34 = arith.mulf %25, %33 : vector<4x1x32xf32>
    %cst_19 = arith.constant dense<0.000000e+00> : vector<4x1xf32>
    %35 = vector.multi_reduction <add>, %34, %cst_19 [2] : vector<4x1x32xf32> to vector<4x1xf32>
    %36 = vector.shape_cast %35 : vector<4x1xf32> to vector<4x1x1xf32>
    %cst_20 = arith.constant 14.2857141 : f32
    %37 = vector.broadcast %cst_20 : f32 to vector<4x1x1xf32>
    %38 = arith.mulf %36, %37 : vector<4x1x1xf32>
    "tpu.trace_start"() <{level = 10 : i32, message = "rqc,rkc->rqk"}> : () -> ()
    %cst_21 = arith.constant dense<0.000000e+00> : vector<4x1x8xf32>
    %39 = tpu.matmul %25, %9, %cst_21 {dimension_numbers = #tpu.dot_dimension_numbers<[2], [2], [1], [1], [0, 0, 0, 1, 1, 1], [0], [0]>} : vector<4x1x32xf32>, vector<4x8x32xf32>, vector<4x1x8xf32> -> vector<4x1x8xf32>
    "tpu.trace_stop"() : () -> ()
    %40 = arith.mulf %9, %9 : vector<4x8x32xf32>
    %cst_22 = arith.constant dense<0.000000e+00> : vector<4x8xf32>
    %41 = vector.multi_reduction <add>, %40, %cst_22 [2] : vector<4x8x32xf32> to vector<4x8xf32>
    %42 = vector.shape_cast %41 : vector<4x8xf32> to vector<4x1x8xf32>
    %cst_23 = arith.constant 1.000000e-24 : f32
    %43 = vector.broadcast %cst_23 : f32 to vector<4x1x8xf32>
    %44 = arith.maximumf %42, %43 : vector<4x1x8xf32>
    %45 = math.rsqrt %44 : vector<4x1x8xf32>
    %46 = arith.mulf %39, %45 : vector<4x1x8xf32>
    %cst_24 = arith.constant 14.2857141 : f32
    %47 = vector.broadcast %cst_24 : f32 to vector<4x1x8xf32>
    %48 = arith.mulf %46, %47 : vector<4x1x8xf32>
    %cst_25 = arith.constant dense<0xFF800000> : vector<4x1xf32>
    %49 = vector.multi_reduction <maximumf>, %48, %cst_25 [2] : vector<4x1x8xf32> to vector<4x1xf32>
    %50 = vector.shape_cast %49 : vector<4x1xf32> to vector<4x1x1xf32>
    %51 = arith.maximumf %38, %50 : vector<4x1x1xf32>
    %52 = arith.subf %38, %51 : vector<4x1x1xf32>
    %53 = math.exp %52 : vector<4x1x1xf32>
    %54 = vector.broadcast %51 : vector<4x1x1xf32> to vector<4x1x8xf32>
    %55 = arith.subf %48, %54 : vector<4x1x8xf32>
    %56 = math.exp %55 : vector<4x1x8xf32>
    %cst_26 = arith.constant dense<0.000000e+00> : vector<4x1xf32>
    %57 = vector.multi_reduction <add>, %56, %cst_26 [2] : vector<4x1x8xf32> to vector<4x1xf32>
    %58 = vector.shape_cast %57 : vector<4x1xf32> to vector<4x1x1xf32>
    %59 = arith.addf %53, %58 : vector<4x1x1xf32>
    %60 = math.log %59 : vector<4x1x1xf32>
    %61 = arith.addf %51, %60 : vector<4x1x1xf32>
    %62 = arith.subf %61, %38 : vector<4x1x1xf32>
    %c0_27 = arith.constant 0 : index
    %c0_28 = arith.constant 0 : index
    %63 = vector.load %arg5[%c0_27, %c0_28] : memref<1x1xf32, #tpu.memory_space<vmem>>, vector<1x1xf32>
    %cst_29 = arith.constant dense<0.000000e+00> : vector<1x1xf32>
    %64 = vector.multi_reduction <add>, %62, %cst_29 [0] : vector<4x1x1xf32> to vector<1x1xf32>
    %65 = arith.addf %63, %64 : vector<1x1xf32>
    %c0_30 = arith.constant 0 : index
    %c0_31 = arith.constant 0 : index
    %66 = vector.load %arg5[%c0_30, %c0_31] : memref<1x1xf32, #tpu.memory_space<vmem>>, vector<1x1xf32>
    tpu.vector_store %arg5[%c0_30, %c0_31], %65 {strides = array<i32>} : memref<1x1xf32, #tpu.memory_space<vmem>>, vector<1x1xf32>,
    %c0_i32_32 = arith.constant 0 : i32
    %67 = arith.cmpi eq, %arg0, %c0_i32_32 : i32
    %68 = arith.extui %67 : i1 to i32
    %c0_i32_33 = arith.constant 0 : i32
    %69 = arith.cmpi ne, %68, %c0_i32_33 : i32
    scf.if %69 {
      %c0_34 = arith.constant 0 : index
      %c0_35 = arith.constant 0 : index
      %70 = vector.load %arg5[%c0_34, %c0_35] : memref<1x1xf32, #tpu.memory_space<vmem>>, vector<1x1xf32>
      %cst_36 = arith.constant 5.000000e-01 : f32
      %71 = vector.broadcast %cst_36 : f32 to vector<1x1xf32>
      %72 = arith.mulf %70, %71 : vector<1x1xf32>
      %c0_37 = arith.constant 0 : index
      %c0_38 = arith.constant 0 : index
      %73 = vector.load %arg5[%c0_37, %c0_38] : memref<1x1xf32, #tpu.memory_space<vmem>>, vector<1x1xf32>
      tpu.vector_store %arg5[%c0_37, %c0_38], %72 {strides = array<i32>} : memref<1x1xf32, #tpu.memory_space<vmem>>, vector<1x1xf32>,
    } else {
    }
    return
  }
  func.func @transform_0(%arg0: i32) -> (i32, i32, i32) {
    %c0_i32 = arith.constant 0 : i32
    %c0_i32_0 = arith.constant 0 : i32
    %c0_i32_1 = arith.constant 0 : i32
    return %arg0, %c0_i32, %c0_i32_0 : i32, i32, i32
  }
  func.func @transform_1(%arg0: i32) -> (i32, i32, i32) {
    %c0_i32 = arith.constant 0 : i32
    %c0_i32_0 = arith.constant 0 : i32
    %c0_i32_1 = arith.constant 0 : i32
    return %arg0, %c0_i32, %c0_i32_0 : i32, i32, i32
  }
  func.func @transform_2(%arg0: i32) -> (i32, i32, i32) {
    %c0_i32 = arith.constant 0 : i32
    %c0_i32_0 = arith.constant 0 : i32
    %c0_i32_1 = arith.constant 0 : i32
    return %arg0, %c0_i32, %c0_i32_0 : i32, i32, i32
  }
  func.func @transform_3(%arg0: i32) -> (i32, i32, i32) {
    %c0_i32 = arith.constant 0 : i32
    %c0_i32_0 = arith.constant 0 : i32
    %c0_i32_1 = arith.constant 0 : i32
    return %arg0, %c0_i32, %c0_i32_0 : i32, i32, i32
  }
  func.func @transform_4(%arg0: i32) -> (i32, i32) {
    %c0_i32 = arith.constant 0 : i32
    %c0_i32_0 = arith.constant 0 : i32
    %c0_i32_1 = arith.constant 0 : i32
    return %c0_i32, %c0_i32_0 : i32, i32
  }
}

</mosaic_0001>

<llo_original>
// kernel: tpu_custom_call.1
$region0: #{tpu_custom_call.1}
  #allocation0 [shape = 'u32[]', space=smem, size = 0x4, offset = 0x4, fixed_abs, tag = 'smem constant byte address 0x4 - core index']
  #allocation1 [shape = 'u32[144,128]{1,0:T(1,128)}', space=vmem, size = 0x12000, scoped, tag = 'internal scratch']
  %s0 = inlined_call_operand.hbm [shape: f32[2,8,32], index: 0, kind: input, shape index: {}]
  %s1 = inlined_call_operand.hbm [shape: f32[2,8,32], index: 1, kind: input, shape index: {}]
  %s2 = inlined_call_operand.hbm [shape: f32[2,8,32], index: 2, kind: input, shape index: {}]
  %s3 = inlined_call_operand.hbm [shape: f32[2,8,32], index: 3, kind: input, shape index: {}]
  %s4 = inlined_call_operand.hbm [shape: f32[1,1], index: 4, kind: output, shape index: {}]
  %s5 = sld [smem:[#allocation0]]
  $region50: #{tpu_custom_call.1} parent=0
    _
  %s7 = ssub.s32 1, %s5
  %s8 = scalar_select 0, %s7, %s5
  $region1: #{tpu_custom_call.1} parent=0
    #allocation2 [shape = 'u8[8192]{0}', space=vmem, size = 0x2000, scoped, tag = 'input window, operand 0, single buffered']
    #allocation3 [shape = 's32[1]{0}', space=sflag, size = 0x4, scoped, tag = 'scoped memory for tpu_custom_call.1']
    #allocation4 [shape = 's32[1]{0}', space=sflag, size = 0x4, scoped, tag = 'scoped memory for tpu_custom_call.1']
    #allocation5 [shape = 'u8[8192]{0}', space=vmem, size = 0x2000, scoped, tag = 'input window, operand 1, single buffered']
    #allocation6 [shape = 's32[1]{0}', space=sflag, size = 0x4, scoped, tag = 'scoped memory for tpu_custom_call.1']
    #allocation7 [shape = 'u8[8192]{0}', space=vmem, size = 0x2000, scoped, tag = 'input window, operand 2, single buffered']
    #allocation8 [shape = 'u8[8192]{0}', space=vmem, size = 0x2000, scoped, tag = 'input window, operand 3, single buffered']
    #allocation9 [shape = 's32[1]{0}', space=sflag, size = 0x4, scoped, tag = 'scoped memory for tpu_custom_call.1']
    #allocation10 [shape = 'u8[512]{0}', space=vmem, size = 0x400, scoped, tag = 'output window, operand 0, single buffered']
    %9 = vsyncpa [#allocation3], 0
    %10 = vsyncpa [#allocation6], 0
    %11 = vsyncpa [#allocation9], 0
    %12 = vsyncpa [#allocation4], 0
    // Predicated region
    $region2: #{tpu_custom_call.1} parent=1 // pred_check
      _
    $region3: #{tpu_custom_call.1} parent=1 // pred_check_branch
      %14 = sbr.rel (0) target = $region5
    $region4: #{tpu_custom_call.1} parent=1 // pred_region
      %s16 = ssub.s32 256, 256
      %17 = vsyncadd [#allocation3], %s16
      %s18 = sshll.u32 [#allocation2], 4
      %s19 = int_to_ptr.vmem [resolvable:$true] %s18
      %24 = dma.hbm_to_vmem [thread:$0]  %s0, 256, %s19, [#allocation3], 128, 128, 8
    $region5: #{tpu_custom_call.1} parent=1 // pred_fallthru
      _
    // Predicated region
    $region6: #{tpu_custom_call.1} parent=1 // pred_check
      _
    $region7: #{tpu_custom_call.1} parent=1 // pred_check_branch
      %26 = sbr.rel (0) target = $region9
    $region8: #{tpu_custom_call.1} parent=1 // pred_region
      %s28 = ssub.s32 256, 256
      %29 = vsyncadd [#allocation6], %s28
      %s30 = sshll.u32 [#allocation5], 4
      %s31 = int_to_ptr.vmem [resolvable:$true] %s30
      %36 = dma.hbm_to_vmem [thread:$0]  %s1, 256, %s31, [#allocation6], 128, 128, 8
    $region9: #{tpu_custom_call.1} parent=1 // pred_fallthru
      _
    // Predicated region
    $region10: #{tpu_custom_call.1} parent=1 // pred_check
      _
    $region11: #{tpu_custom_call.1} parent=1 // pred_check_branch
      %38 = sbr.rel (0) target = $region13
    $region12: #{tpu_custom_call.1} parent=1 // pred_region
      %s40 = ssub.s32 256, 256
      %41 = vsyncadd [#allocation6], %s40
      %s42 = sshll.u32 [#allocation7], 4
      %s43 = int_to_ptr.vmem [resolvable:$true] %s42
      %48 = dma.hbm_to_vmem [thread:$0]  %s2, 256, %s43, [#allocation6], 128, 128, 8
    $region13: #{tpu_custom_call.1} parent=1 // pred_fallthru
      _
    // Predicated region
    $region14: #{tpu_custom_call.1} parent=1 // pred_check
      _
    $region15: #{tpu_custom_call.1} parent=1 // pred_check_branch
      %50 = sbr.rel (0) target = $region17
    $region16: #{tpu_custom_call.1} parent=1 // pred_region
      %s52 = ssub.s32 256, 256
      %53 = vsyncadd [#allocation9], %s52
      %s54 = sshll.u32 [#allocation8], 4
      %s55 = int_to_ptr.vmem [resolvable:$true] %s54
      %60 = dma.hbm_to_vmem [thread:$0]  %s3, 256, %s55, [#allocation9], 128, 128, 8
    $region17: #{tpu_custom_call.1} parent=1 // pred_fallthru
      _
    // Predicated region
    $region18: #{tpu_custom_call.1} parent=1 // pred_check
      _
    $region19: #{tpu_custom_call.1} parent=1 // pred_check_branch
      %62 = sbr.rel (0) target = $region21
    $region20: #{tpu_custom_call.1} parent=1 // pred_region
      %63 = dma.done [#allocation3], 256
    $region21: #{tpu_custom_call.1} parent=1 // pred_fallthru
      _
    // Predicated region
    $region22: #{tpu_custom_call.1} parent=1 // pred_check
      _
    $region23: #{tpu_custom_call.1} parent=1 // pred_check_branch
      %65 = sbr.rel (0) target = $region25
    $region24: #{tpu_custom_call.1} parent=1 // pred_region
      %66 = dma.done [#allocation6], 256
    $region25: #{tpu_custom_call.1} parent=1 // pred_fallthru
      _
    // Predicated region
    $region26: #{tpu_custom_call.1} parent=1 // pred_check
      _
    $region27: #{tpu_custom_call.1} parent=1 // pred_check_branch
      %68 = sbr.rel (0) target = $region29
    $region28: #{tpu_custom_call.1} parent=1 // pred_region
      %69 = dma.done [#allocation6], 256
    $region29: #{tpu_custom_call.1} parent=1 // pred_fallthru
      _
    // Predicated region
    $region30: #{tpu_custom_call.1} parent=1 // pred_check
      _
    $region31: #{tpu_custom_call.1} parent=1 // pred_check_branch
      %71 = sbr.rel (0) target = $region33
    $region32: #{tpu_custom_call.1} parent=1 // pred_region
      %72 = dma.done [#allocation9], 256
    $region33: #{tpu_custom_call.1} parent=1 // pred_fallthru
      _
    %p73 = scmp.eq.s32.totalorder 0, 0
    // Predicated region
    $region34: #{tpu_custom_call.1} parent=1 // pred_check
      %p74 = pneg %p73
    $region35: #{tpu_custom_call.1} parent=1 // pred_check_branch
      %76 = sbr.rel (%p74) target = $region37
    $region36: #{tpu_custom_call.1} parent=1 // pred_region
      %vm77 = vcmask 0
      %78 = vst.msk [vmem:[#allocation10] sm:$0x1] %vm77, 0.0
    $region37: #{tpu_custom_call.1} parent=1 // pred_fallthru
      _
    %v79 = vld [vmem:[#allocation2] sm:$0xff]
    %v80 = vld [vmem:[#allocation2 + $0x8] sm:$0xff]
    %v81 = vld [vmem:[#allocation5] sm:$0xff]
    %v82 = vld [vmem:[#allocation5 + $0x8] sm:$0xff]
    %v83 = vld [vmem:[#allocation7] sm:$0xff]
    %v84 = vld [vmem:[#allocation7 + $0x8] sm:$0xff]
    %v85 = vld [vmem:[#allocation8] sm:$0xff]
    %v86 = vld [vmem:[#allocation8 + $0x8] sm:$0xff]
    %vm87 = vcmask 261120
    %v88 = vsel %vm87, %v79, 0.0
    %v89 = vrot.slane %v88, 4
    %v90 = vadd.f32 %v88, %v89
    %v91 = vrot.slane %v90, 2
    %v92 = vadd.f32 %v90, %v91
    %v93 = vrot.slane %v92, 1
    %v94 = vadd.f32 %v92, %v93
    %v95 = vsel %vm87, %v80, 0.0
    %v96 = vrot.slane %v95, 4
    %v97 = vadd.f32 %v95, %v96
    %v98 = vrot.slane %v97, 2
    %v99 = vadd.f32 %v97, %v98
    %v100 = vrot.slane %v99, 1
    %v101 = vadd.f32 %v99, %v100
    %v102 = vsel %vm87, %v85, 0.0
    %v103 = vrot.slane %v102, 4
    %v104 = vadd.f32 %v102, %v103
    %v105 = vrot.slane %v104, 2
    %v106 = vadd.f32 %v104, %v105
    %v107 = vrot.slane %v106, 1
    %v108 = vadd.f32 %v106, %v107
    %v109 = vsel %vm87, %v86, 0.0
    %v110 = vrot.slane %v109, 4
    %v111 = vadd.f32 %v109, %v110
    %v112 = vrot.slane %v111, 2
    %v113 = vadd.f32 %v111, %v112
    %v114 = vrot.slane %v113, 1
    %v115 = vadd.f32 %v113, %v114
    %v116 = vmul.f32 %v94, 0.125
    %v117 = vmul.f32 %v101, 0.125
    %v118 = vmul.f32 %v108, 0.125
    %v119 = vmul.f32 %v115, 0.125
    %v120 = vsel %vm87, %v81, 0.0
    %v121 = vrot.slane %v120, 4
    %v122 = vadd.f32 %v120, %v121
    %v123 = vrot.slane %v122, 2
    %v124 = vadd.f32 %v122, %v123
    %v125 = vrot.slane %v124, 1
    %v126 = vadd.f32 %v124, %v125
    %v127 = vsel %vm87, %v82, 0.0
    %v128 = vrot.slane %v127, 4
    %v129 = vadd.f32 %v127, %v128
    %v130 = vrot.slane %v129, 2
    %v131 = vadd.f32 %v129, %v130
    %v132 = vrot.slane %v131, 1
    %v133 = vadd.f32 %v131, %v132
    %v134 = vsel %vm87, %v83, 0.0
    %v135 = vrot.slane %v134, 4
    %v136 = vadd.f32 %v134, %v135
    %v137 = vrot.slane %v136, 2
    %v138 = vadd.f32 %v136, %v137
    %v139 = vrot.slane %v138, 1
    %v140 = vadd.f32 %v138, %v139
    %v141 = vsel %vm87, %v84, 0.0
    %v142 = vrot.slane %v141, 4
    %v143 = vadd.f32 %v141, %v142
    %v144 = vrot.slane %v143, 2
    %v145 = vadd.f32 %v143, %v144
    %v146 = vrot.slane %v145, 1
    %v147 = vadd.f32 %v145, %v146
    %v148 = vmul.f32 %v126, 0.125
    %v149 = vmul.f32 %v133, 0.125
    %v150 = vmul.f32 %v140, 0.125
    %v151 = vmul.f32 %v147, 0.125
    %v152 = vmul.f32 %v116, %v116
    %v153 = vmul.f32 %v117, %v117
    %v154 = vmul.f32 %v118, %v118
    %v155 = vmul.f32 %v119, %v119
    %v156 = vsel %vm87, %v152, 0.0
    %157 = vadd.xlane.f32.xlu0 %v156
    %v158 = vpop.xlane.xlu0 %157
    %v159 = vsel %vm87, %v153, 0.0
    %160 = vadd.xlane.f32.xlu0 %v159
    %v161 = vpop.xlane.xlu0 %160
    %v162 = vsel %vm87, %v154, 0.0
    %163 = vadd.xlane.f32.xlu0 %v162
    %v164 = vpop.xlane.xlu0 %163
    %v165 = vsel %vm87, %v155, 0.0
    %166 = vadd.xlane.f32.xlu0 %v165
    %v167 = vpop.xlane.xlu0 %166
    %v168 = vmax.f32 %v158, 1e-24
    %v169 = vmax.f32 %v161, 1e-24
    %v170 = vmax.f32 %v164, 1e-24
    %v171 = vmax.f32 %v167, 1e-24
    %v172 = vrsqrt.pop %v168
    %v173 = vrsqrt.pop %v169
    %v174 = vrsqrt.pop %v170
    %v175 = vrsqrt.pop %v171
    %v176 = vmul.f32 %v116, %v172
    %v177 = vmul.f32 %v117, %v173
    %v178 = vmul.f32 %v118, %v174
    %v179 = vmul.f32 %v119, %v175
    %v180 = vmul.f32 %v148, %v148
    %v181 = vmul.f32 %v149, %v149
    %v182 = vmul.f32 %v150, %v150
    %v183 = vmul.f32 %v151, %v151
    %v184 = vsel %vm87, %v180, 0.0
    %185 = vadd.xlane.f32.xlu0 %v184
    %v186 = vpop.xlane.xlu0 %185
    %v187 = vsel %vm87, %v181, 0.0
    %188 = vadd.xlane.f32.xlu0 %v187
    %v189 = vpop.xlane.xlu0 %188
    %v190 = vsel %vm87, %v182, 0.0
    %191 = vadd.xlane.f32.xlu0 %v190
    %v192 = vpop.xlane.xlu0 %191
    %v193 = vsel %vm87, %v183, 0.0
    %194 = vadd.xlane.f32.xlu0 %v193
    %v195 = vpop.xlane.xlu0 %194
    %v196 = vmax.f32 %v186, 1e-24
    %v197 = vmax.f32 %v189, 1e-24
    %v198 = vmax.f32 %v192, 1e-24
    %v199 = vmax.f32 %v195, 1e-24
    %v200 = vrsqrt.pop %v196
    %v201 = vrsqrt.pop %v197
    %v202 = vrsqrt.pop %v198
    %v203 = vrsqrt.pop %v199
    %v204 = vmul.f32 %v148, %v200
    %v205 = vmul.f32 %v149, %v201
    %v206 = vmul.f32 %v150, %v202
    %v207 = vmul.f32 %v151, %v203
    %v208 = vmul.f32 %v176, %v204
    %v209 = vmul.f32 %v177, %v205
    %v210 = vmul.f32 %v178, %v206
    %v211 = vmul.f32 %v179, %v207
    %v212 = vsel %vm87, %v208, 0.0
    %213 = vadd.xlane.f32.xlu0 %v212
    %v214 = vpop.xlane.xlu0 %213
    %v215 = vsel %vm87, %v209, 0.0
    %216 = vadd.xlane.f32.xlu0 %v215
    %v217 = vpop.xlane.xlu0 %216
    %v218 = vsel %vm87, %v210, 0.0
    %219 = vadd.xlane.f32.xlu0 %v218
    %v220 = vpop.xlane.xlu0 %219
    %v221 = vsel %vm87, %v211, 0.0
    %222 = vadd.xlane.f32.xlu0 %v221
    %v223 = vpop.xlane.xlu0 %222
    %v224 = vmul.f32 %v214, 14.285714
    %v225 = vmul.f32 %v217, 14.285714
    %v226 = vmul.f32 %v220, 14.285714
    %v227 = vmul.f32 %v223, 14.285714
    %v229 = vsel %vm87, %v176, 0
    %v232 = vsel %vm87, %v83, 0
    %234 = vmatprep.subr.mxu0 0.0
    %235 = vmatpush1.xpose.msra.mxu0 %v232
    %236 = vmatprep.subr.mxu0 0.0
    %237 = vmatpush1.xpose.msra.mxu0 0.0
    %238 = vmatprep.subr.mxu0 0.0
    %239 = vmatpush1.xpose.msra.mxu0 0.0
    %240 = vmatprep.subr.mxu0 0.0
    %241 = vmatpush1.xpose.msra.mxu0 0.0
    %242 = vmatprep.subr.mxu0 0.0
    %243 = vmatpush1.xpose.msra.mxu0 0.0
    %244 = vmatprep.subr.mxu0 0.0
    %245 = vmatpush1.xpose.msra.mxu0 0.0
    %246 = vmatprep.subr.mxu0 0.0
    %247 = vmatpush1.xpose.msra.mxu0 0.0
    %248 = vmatprep.subr.mxu0 0.0
    %249 = vmatpush1.xpose.msra.mxu0 0.0
    %250 = vmatprep.subr.mxu0 0.0
    %251 = vmatpush1.xpose.msra.mxu0 0.0
    %252 = vmatprep.subr.mxu0 0.0
    %253 = vmatpush1.xpose.msra.mxu0 0.0
    %254 = vmatprep.subr.mxu0 0.0
    %255 = vmatpush1.xpose.msra.mxu0 0.0
    %256 = vmatprep.subr.mxu0 0.0
    %257 = vmatpush1.xpose.msra.mxu0 0.0
    %258 = vmatprep.subr.mxu0 0.0
    %259 = vmatpush1.xpose.msra.mxu0 0.0
    %260 = vmatprep.subr.mxu0 0.0
    %261 = vmatpush1.xpose.msra.mxu0 0.0
    %262 = vmatprep.subr.mxu0 0.0
    %263 = vmatpush1.xpose.msra.mxu0 0.0
    %264 = vmatprep.subr.mxu0 0.0
    %265 = vmatpush1.xpose.msra.mxu0 0.0
    %266 = vmatprep.subr.mxu0 0.0
    %267 = vmatpush1.xpose.msra.mxu0 0.0
    %268 = vmatprep.subr.mxu0 0.0
    %269 = vmatpush1.xpose.msra.mxu0 0.0
    %270 = vmatprep.subr.mxu0 0.0
    %271 = vmatpush1.xpose.msra.mxu0 0.0
    %272 = vmatprep.subr.mxu0 0.0
    %273 = vmatpush1.xpose.msra.mxu0 0.0
    %274 = vmatprep.subr.mxu0 0.0
    %275 = vmatpush1.xpose.msra.mxu0 0.0
    %276 = vmatprep.subr.mxu0 0.0
    %277 = vmatpush1.xpose.msra.mxu0 0.0
    %278 = vmatprep.subr.mxu0 0.0
    %279 = vmatpush1.xpose.msra.mxu0 0.0
    %280 = vmatprep.subr.mxu0 0.0
    %281 = vmatpush1.xpose.msra.mxu0 0.0
    %282 = vmatprep.subr.mxu0 0.0
    %283 = vmatpush1.xpose.msra.mxu0 0.0
    %284 = vmatprep.subr.mxu0 0.0
    %285 = vmatpush1.xpose.msra.mxu0 0.0
    %286 = vmatprep.subr.mxu0 0.0
    %287 = vmatpush1.xpose.msra.mxu0 0.0
    %288 = vmatprep.subr.mxu0 0.0
    %289 = vmatpush1.xpose.msra.mxu0 0.0
    %290 = vmatprep.subr.mxu0 0.0
    %291 = vmatpush1.xpose.msra.mxu0 0.0
    %292 = vmatprep.subr.mxu0 0.0
    %293 = vmatpush1.xpose.msra.mxu0 0.0
    %294 = vmatprep.subr.mxu0 0.0
    %295 = vmatpush1.xpose.msra.mxu0 0.0
    %296 = vmatprep.subr.mxu0 0.0
    %297 = vmatpush1.xpose.msra.mxu0 0.0
    %298 = vmatprep.mubr.f32.mxu0 0.0
    %299 = vmatmul.mubr.f32.gmra.mrb[0].mxu0 %v229
    %v300 = vpop.f32.mrb[0].mxu0
    %v301 = vadd.f32 0.0, %v300
    %v302 = vpop.f32.mrb[0].mxu0
    %303 = vdwg.mxu0
    %v305 = vsel %vm87, %v177, 0
    %v308 = vsel %vm87, %v84, 0
    %310 = vmatprep.subr.mxu0 0.0
    %311 = vmatpush1.xpose.msra.mxu0 %v308
    %312 = vmatprep.subr.mxu0 0.0
    %313 = vmatpush1.xpose.msra.mxu0 0.0
    %314 = vmatprep.subr.mxu0 0.0
    %315 = vmatpush1.xpose.msra.mxu0 0.0
    %316 = vmatprep.subr.mxu0 0.0
    %317 = vmatpush1.xpose.msra.mxu0 0.0
    %318 = vmatprep.subr.mxu0 0.0
    %319 = vmatpush1.xpose.msra.mxu0 0.0
    %320 = vmatprep.subr.mxu0 0.0
    %321 = vmatpush1.xpose.msra.mxu0 0.0
    %322 = vmatprep.subr.mxu0 0.0
    %323 = vmatpush1.xpose.msra.mxu0 0.0
    %324 = vmatprep.subr.mxu0 0.0
    %325 = vmatpush1.xpose.msra.mxu0 0.0
    %326 = vmatprep.subr.mxu0 0.0
    %327 = vmatpush1.xpose.msra.mxu0 0.0
    %328 = vmatprep.subr.mxu0 0.0
    %329 = vmatpush1.xpose.msra.mxu0 0.0
    %330 = vmatprep.subr.mxu0 0.0
    %331 = vmatpush1.xpose.msra.mxu0 0.0
    %332 = vmatprep.subr.mxu0 0.0
    %333 = vmatpush1.xpose.msra.mxu0 0.0
    %334 = vmatprep.subr.mxu0 0.0
    %335 = vmatpush1.xpose.msra.mxu0 0.0
    %336 = vmatprep.subr.mxu0 0.0
    %337 = vmatpush1.xpose.msra.mxu0 0.0
    %338 = vmatprep.subr.mxu0 0.0
    %339 = vmatpush1.xpose.msra.mxu0 0.0
    %340 = vmatprep.subr.mxu0 0.0
    %341 = vmatpush1.xpose.msra.mxu0 0.0
    %342 = vmatprep.subr.mxu0 0.0
    %343 = vmatpush1.xpose.msra.mxu0 0.0
    %344 = vmatprep.subr.mxu0 0.0
    %345 = vmatpush1.xpose.msra.mxu0 0.0
    %346 = vmatprep.subr.mxu0 0.0
    %347 = vmatpush1.xpose.msra.mxu0 0.0
    %348 = vmatprep.subr.mxu0 0.0
    %349 = vmatpush1.xpose.msra.mxu0 0.0
    %350 = vmatprep.subr.mxu0 0.0
    %351 = vmatpush1.xpose.msra.mxu0 0.0
    %352 = vmatprep.subr.mxu0 0.0
    %353 = vmatpush1.xpose.msra.mxu0 0.0
    %354 = vmatprep.subr.mxu0 0.0
    %355 = vmatpush1.xpose.msra.mxu0 0.0
    %356 = vmatprep.subr.mxu0 0.0
    %357 = vmatpush1.xpose.msra.mxu0 0.0
    %358 = vmatprep.subr.mxu0 0.0
    %359 = vmatpush1.xpose.msra.mxu0 0.0
    %360 = vmatprep.subr.mxu0 0.0
    %361 = vmatpush1.xpose.msra.mxu0 0.0
    %362 = vmatprep.subr.mxu0 0.0
    %363 = vmatpush1.xpose.msra.mxu0 0.0
    %364 = vmatprep.subr.mxu0 0.0
    %365 = vmatpush1.xpose.msra.mxu0 0.0
    %366 = vmatprep.subr.mxu0 0.0
    %367 = vmatpush1.xpose.msra.mxu0 0.0
    %368 = vmatprep.subr.mxu0 0.0
    %369 = vmatpush1.xpose.msra.mxu0 0.0
    %370 = vmatprep.subr.mxu0 0.0
    %371 = vmatpush1.xpose.msra.mxu0 0.0
    %372 = vmatprep.subr.mxu0 0.0
    %373 = vmatpush1.xpose.msra.mxu0 0.0
    %374 = vmatprep.mubr.f32.mxu0 0.0
    %375 = vmatmul.mubr.f32.gmra.mrb[0].mxu0 %v305
    %v376 = vpop.f32.mrb[0].mxu0
    %v377 = vadd.f32 0.0, %v376
    %v378 = vpop.f32.mrb[0].mxu0
    %379 = vdwg.mxu0
    %v381 = vsel %vm87, %v178, 0
    %v384 = vsel %vm87, %v81, 0
    %386 = vmatprep.subr.mxu0 0.0
    %387 = vmatpush1.xpose.msra.mxu0 %v384
    %388 = vmatprep.subr.mxu0 0.0
    %389 = vmatpush1.xpose.msra.mxu0 0.0
    %390 = vmatprep.subr.mxu0 0.0
    %391 = vmatpush1.xpose.msra.mxu0 0.0
    %392 = vmatprep.subr.mxu0 0.0
    %393 = vmatpush1.xpose.msra.mxu0 0.0
    %394 = vmatprep.subr.mxu0 0.0
    %395 = vmatpush1.xpose.msra.mxu0 0.0
    %396 = vmatprep.subr.mxu0 0.0
    %397 = vmatpush1.xpose.msra.mxu0 0.0
    %398 = vmatprep.subr.mxu0 0.0
    %399 = vmatpush1.xpose.msra.mxu0 0.0
    %400 = vmatprep.subr.mxu0 0.0
    %401 = vmatpush1.xpose.msra.mxu0 0.0
    %402 = vmatprep.subr.mxu0 0.0
    %403 = vmatpush1.xpose.msra.mxu0 0.0
    %404 = vmatprep.subr.mxu0 0.0
    %405 = vmatpush1.xpose.msra.mxu0 0.0
    %406 = vmatprep.subr.mxu0 0.0
    %407 = vmatpush1.xpose.msra.mxu0 0.0
    %408 = vmatprep.subr.mxu0 0.0
    %409 = vmatpush1.xpose.msra.mxu0 0.0
    %410 = vmatprep.subr.mxu0 0.0
    %411 = vmatpush1.xpose.msra.mxu0 0.0
    %412 = vmatprep.subr.mxu0 0.0
    %413 = vmatpush1.xpose.msra.mxu0 0.0
    %414 = vmatprep.subr.mxu0 0.0
    %415 = vmatpush1.xpose.msra.mxu0 0.0
    %416 = vmatprep.subr.mxu0 0.0
    %417 = vmatpush1.xpose.msra.mxu0 0.0
    %418 = vmatprep.subr.mxu0 0.0
    %419 = vmatpush1.xpose.msra.mxu0 0.0
    %420 = vmatprep.subr.mxu0 0.0
    %421 = vmatpush1.xpose.msra.mxu0 0.0
    %422 = vmatprep.subr.mxu0 0.0
    %423 = vmatpush1.xpose.msra.mxu0 0.0
    %424 = vmatprep.subr.mxu0 0.0
    %425 = vmatpush1.xpose.msra.mxu0 0.0
    %426 = vmatprep.subr.mxu0 0.0
    %427 = vmatpush1.xpose.msra.mxu0 0.0
    %428 = vmatprep.subr.mxu0 0.0
    %429 = vmatpush1.xpose.msra.mxu0 0.0
    %430 = vmatprep.subr.mxu0 0.0
    %431 = vmatpush1.xpose.msra.mxu0 0.0
    %432 = vmatprep.subr.mxu0 0.0
    %433 = vmatpush1.xpose.msra.mxu0 0.0
    %434 = vmatprep.subr.mxu0 0.0
    %435 = vmatpush1.xpose.msra.mxu0 0.0
    %436 = vmatprep.subr.mxu0 0.0
    %437 = vmatpush1.xpose.msra.mxu0 0.0
    %438 = vmatprep.subr.mxu0 0.0
    %439 = vmatpush1.xpose.msra.mxu0 0.0
    %440 = vmatprep.subr.mxu0 0.0
    %441 = vmatpush1.xpose.msra.mxu0 0.0
    %442 = vmatprep.subr.mxu0 0.0
    %443 = vmatpush1.xpose.msra.mxu0 0.0
    %444 = vmatprep.subr.mxu0 0.0
    %445 = vmatpush1.xpose.msra.mxu0 0.0
    %446 = vmatprep.subr.mxu0 0.0
    %447 = vmatpush1.xpose.msra.mxu0 0.0
    %448 = vmatprep.subr.mxu0 0.0
    %449 = vmatpush1.xpose.msra.mxu0 0.0
    %450 = vmatprep.mubr.f32.mxu0 0.0
    %451 = vmatmul.mubr.f32.gmra.mrb[0].mxu0 %v381
    %v452 = vpop.f32.mrb[0].mxu0
    %v453 = vadd.f32 0.0, %v452
    %v454 = vpop.f32.mrb[0].mxu0
    %455 = vdwg.mxu0
    %v457 = vsel %vm87, %v179, 0
    %v460 = vsel %vm87, %v82, 0
    %462 = vmatprep.subr.mxu0 0.0
    %463 = vmatpush1.xpose.msra.mxu0 %v460
    %464 = vmatprep.subr.mxu0 0.0
    %465 = vmatpush1.xpose.msra.mxu0 0.0
    %466 = vmatprep.subr.mxu0 0.0
    %467 = vmatpush1.xpose.msra.mxu0 0.0
    %468 = vmatprep.subr.mxu0 0.0
    %469 = vmatpush1.xpose.msra.mxu0 0.0
    %470 = vmatprep.subr.mxu0 0.0
    %471 = vmatpush1.xpose.msra.mxu0 0.0
    %472 = vmatprep.subr.mxu0 0.0
    %473 = vmatpush1.xpose.msra.mxu0 0.0
    %474 = vmatprep.subr.mxu0 0.0
    %475 = vmatpush1.xpose.msra.mxu0 0.0
    %476 = vmatprep.subr.mxu0 0.0
    %477 = vmatpush1.xpose.msra.mxu0 0.0
    %478 = vmatprep.subr.mxu0 0.0
    %479 = vmatpush1.xpose.msra.mxu0 0.0
    %480 = vmatprep.subr.mxu0 0.0
    %481 = vmatpush1.xpose.msra.mxu0 0.0
    %482 = vmatprep.subr.mxu0 0.0
    %483 = vmatpush1.xpose.msra.mxu0 0.0
    %484 = vmatprep.subr.mxu0 0.0
    %485 = vmatpush1.xpose.msra.mxu0 0.0
    %486 = vmatprep.subr.mxu0 0.0
    %487 = vmatpush1.xpose.msra.mxu0 0.0
    %488 = vmatprep.subr.mxu0 0.0
    %489 = vmatpush1.xpose.msra.mxu0 0.0
    %490 = vmatprep.subr.mxu0 0.0
    %491 = vmatpush1.xpose.msra.mxu0 0.0
    %492 = vmatprep.subr.mxu0 0.0
    %493 = vmatpush1.xpose.msra.mxu0 0.0
    %494 = vmatprep.subr.mxu0 0.0
    %495 = vmatpush1.xpose.msra.mxu0 0.0
    %496 = vmatprep.subr.mxu0 0.0
    %497 = vmatpush1.xpose.msra.mxu0 0.0
    %498 = vmatprep.subr.mxu0 0.0
    %499 = vmatpush1.xpose.msra.mxu0 0.0
    %500 = vmatprep.subr.mxu0 0.0
    %501 = vmatpush1.xpose.msra.mxu0 0.0
    %502 = vmatprep.subr.mxu0 0.0
    %503 = vmatpush1.xpose.msra.mxu0 0.0
    %504 = vmatprep.subr.mxu0 0.0
    %505 = vmatpush1.xpose.msra.mxu0 0.0
    %506 = vmatprep.subr.mxu0 0.0
    %507 = vmatpush1.xpose.msra.mxu0 0.0
    %508 = vmatprep.subr.mxu0 0.0
    %509 = vmatpush1.xpose.msra.mxu0 0.0
    %510 = vmatprep.subr.mxu0 0.0
    %511 = vmatpush1.xpose.msra.mxu0 0.0
    %512 = vmatprep.subr.mxu0 0.0
    %513 = vmatpush1.xpose.msra.mxu0 0.0
    %514 = vmatprep.subr.mxu0 0.0
    %515 = vmatpush1.xpose.msra.mxu0 0.0
    %516 = vmatprep.subr.mxu0 0.0
    %517 = vmatpush1.xpose.msra.mxu0 0.0
    %518 = vmatprep.subr.mxu0 0.0
    %519 = vmatpush1.xpose.msra.mxu0 0.0
    %520 = vmatprep.subr.mxu0 0.0
    %521 = vmatpush1.xpose.msra.mxu0 0.0
    %522 = vmatprep.subr.mxu0 0.0
    %523 = vmatpush1.xpose.msra.mxu0 0.0
    %524 = vmatprep.subr.mxu0 0.0
    %525 = vmatpush1.xpose.msra.mxu0 0.0
    %526 = vmatprep.mubr.f32.mxu0 0.0
    %527 = vmatmul.mubr.f32.gmra.mrb[0].mxu0 %v457
    %v528 = vpop.f32.mrb[0].mxu0
    %v529 = vadd.f32 0.0, %v528
    %v530 = vpop.f32.mrb[0].mxu0
    %531 = vdwg.mxu0
    %v532 = vmul.f32 %v83, %v83
    %v533 = vmul.f32 %v84, %v84
    %v534 = vmul.f32 %v81, %v81
    %v535 = vmul.f32 %v82, %v82
    %v536 = vsel %vm87, %v532, 0.0
    %537 = vadd.xlane.f32.xlu0 %v536
    %v538 = vpop.xlane.xlu0 %537
    %v539 = vsel %vm87, %v533, 0.0
    %540 = vadd.xlane.f32.xlu0 %v539
    %v541 = vpop.xlane.xlu0 %540
    %v542 = vsel %vm87, %v534, 0.0
    %543 = vadd.xlane.f32.xlu0 %v542
    %v544 = vpop.xlane.xlu0 %543
    %v545 = vsel %vm87, %v535, 0.0
    %546 = vadd.xlane.f32.xlu0 %v545
    %v547 = vpop.xlane.xlu0 %546
    %v548 = vmax.f32 %v538, 1e-24
    %v549 = vmax.f32 %v541, 1e-24
    %v550 = vmax.f32 %v544, 1e-24
    %v551 = vmax.f32 %v547, 1e-24
    %v552 = vrsqrt.pop %v548
    %v553 = vrsqrt.pop %v549
    %v554 = vrsqrt.pop %v550
    %v555 = vrsqrt.pop %v551
    %v560 = vlaneseq
    %v561 = vand.u32 %v560, 127
    %v562 = vlaneseq
    %v563 = vshrl.u32 %v562, 7
    %v564 = vsub.s32 %v561, %v563
    %v565 = vrot.slane %v552, %v564
    %v566 = vlaneseq
    %v567 = vshrl.u32 %v566, 7
    %v568 = vsub.s32 %v561, %v567
    %v569 = vrot.slane %v553, %v568
    %v570 = vlaneseq
    %v571 = vshrl.u32 %v570, 7
    %v572 = vsub.s32 %v561, %v571
    %v573 = vrot.slane %v554, %v572
    %v574 = vlaneseq
    %v575 = vshrl.u32 %v574, 7
    %v576 = vsub.s32 %v561, %v575
    %v577 = vrot.slane %v555, %v576
    %v582 = vmul.f32 %v301, %v565
    %v583 = vmul.f32 %v377, %v569
    %v584 = vmul.f32 %v453, %v573
    %v585 = vmul.f32 %v529, %v577
    %v586 = vmul.f32 %v582, 14.285714
    %v587 = vmul.f32 %v583, 14.285714
    %v588 = vmul.f32 %v584, 14.285714
    %v589 = vmul.f32 %v585, 14.285714
    %vm590 = vcmask 57344
    %v591 = vsel %vm590, %v586, -inf
    %592 = vmax.xlane.f32.xlu0 %v591
    %v593 = vpop.xlane.xlu0 %592
    %v594 = vsel %vm590, %v587, -inf
    %595 = vmax.xlane.f32.xlu0 %v594
    %v596 = vpop.xlane.xlu0 %595
    %v597 = vsel %vm590, %v588, -inf
    %598 = vmax.xlane.f32.xlu0 %v597
    %v599 = vpop.xlane.xlu0 %598
    %v600 = vsel %vm590, %v589, -inf
    %601 = vmax.xlane.f32.xlu0 %v600
    %v602 = vpop.xlane.xlu0 %601
    %v603 = vmax.f32 %v224, %v593
    %v604 = vmax.f32 %v225, %v596
    %v605 = vmax.f32 %v226, %v599
    %v606 = vmax.f32 %v227, %v602
    %v607 = vsub.f32 %v224, %v603
    %v608 = vsub.f32 %v225, %v604
    %v609 = vsub.f32 %v226, %v605
    %v610 = vsub.f32 %v227, %v606
    %v611 = vmul.f32 %v607, 1.442695
    %v612 = vpow.pop %v611
    %v613 = vmul.f32 %v608, 1.442695
    %v614 = vpow.pop %v613
    %v615 = vmul.f32 %v609, 1.442695
    %v616 = vpow.pop %v615
    %v617 = vmul.f32 %v610, 1.442695
    %v618 = vpow.pop %v617
    %v619 = vsub.f32 %v586, %v603
    %v620 = vsub.f32 %v587, %v604
    %v621 = vsub.f32 %v588, %v605
    %v622 = vsub.f32 %v589, %v606
    %v623 = vmul.f32 %v619, 1.442695
    %v624 = vpow.pop %v623
    %v625 = vmul.f32 %v620, 1.442695
    %v626 = vpow.pop %v625
    %v627 = vmul.f32 %v621, 1.442695
    %v628 = vpow.pop %v627
    %v629 = vmul.f32 %v622, 1.442695
    %v630 = vpow.pop %v629
    %v631 = vsel %vm590, %v624, 0.0
    %632 = vadd.xlane.f32.xlu0 %v631
    %v633 = vpop.xlane.xlu0 %632
    %v634 = vsel %vm590, %v626, 0.0
    %635 = vadd.xlane.f32.xlu0 %v634
    %v636 = vpop.xlane.xlu0 %635
    %v637 = vsel %vm590, %v628, 0.0
    %638 = vadd.xlane.f32.xlu0 %v637
    %v639 = vpop.xlane.xlu0 %638
    %v640 = vsel %vm590, %v630, 0.0
    %641 = vadd.xlane.f32.xlu0 %v640
    %v642 = vpop.xlane.xlu0 %641
    %v643 = vadd.f32 %v612, %v633
    %v644 = vadd.f32 %v614, %v636
    %v645 = vadd.f32 %v616, %v639
    %v646 = vadd.f32 %v618, %v642
    %v647 = vlog2.pop %v643
    %v648 = vmul.f32 %v647, 0.6931472
    %v649 = vlog2.pop %v644
    %v650 = vmul.f32 %v649, 0.6931472
    %v651 = vlog2.pop %v645
    %v652 = vmul.f32 %v651, 0.6931472
    %v653 = vlog2.pop %v646
    %v654 = vmul.f32 %v653, 0.6931472
    %v655 = vadd.f32 %v603, %v648
    %v656 = vadd.f32 %v604, %v650
    %v657 = vadd.f32 %v605, %v652
    %v658 = vadd.f32 %v606, %v654
    %v659 = vsub.f32 %v655, %v224
    %v660 = vsub.f32 %v656, %v225
    %v661 = vsub.f32 %v657, %v226
    %v662 = vsub.f32 %v658, %v227
    %v663 = vld [vmem:[#allocation10] sm:$0x1]
    %vm664 = vcmask 1040384
    %v665 = vsel %vm664, %v659, 0.0
    %v666 = vsel %vm664, %v660, 0.0
    %v667 = vadd.f32 %v665, %v666
    %v668 = vsel %vm664, %v661, 0.0
    %v669 = vadd.f32 %v667, %v668
    %v670 = vsel %vm664, %v662, 0.0
    %v671 = vadd.f32 %v669, %v670
    %v672 = vadd.f32 %v663, %v671
    %vm673 = vcmask 0
    %674 = vst.msk [vmem:[#allocation10] sm:$0x1] %vm673, %v672
    // Predicated region
    $region38: #{tpu_custom_call.1} parent=1 // pred_check
      %p675 = pneg %p73
    $region39: #{tpu_custom_call.1} parent=1 // pred_check_branch
      %677 = sbr.rel (%p675) target = $region41
    $region40: #{tpu_custom_call.1} parent=1 // pred_region
      %v678 = vld [vmem:[#allocation10] sm:$0x1]
      %v679 = vmul.f32 %v678, 0.5
      %680 = vst.msk [vmem:[#allocation10] sm:$0x1] %vm673, %v679
    $region41: #{tpu_custom_call.1} parent=1 // pred_fallthru
      _
    // Predicated region
    $region42: #{tpu_custom_call.1} parent=1 // pred_check
      _
    $region43: #{tpu_custom_call.1} parent=1 // pred_check_branch
      %682 = sbr.rel (0) target = $region45
    $region44: #{tpu_custom_call.1} parent=1 // pred_region
      %s684 = ssub.s32 16, 16
      %685 = vsyncadd [#allocation4], %s684
      %s687 = sshll.u32 [#allocation10], 4
      %s688 = int_to_ptr.vmem [resolvable:$true] %s687
      %690 = dma.vmem_to_hbm [thread:$0]  %s688, 16, %s4, [#allocation4]
    $region45: #{tpu_custom_call.1} parent=1 // pred_fallthru
      _
    // Predicated region
    $region46: #{tpu_custom_call.1} parent=1 // pred_check
      _
    $region47: #{tpu_custom_call.1} parent=1 // pred_check_branch
      %692 = sbr.rel (0) target = $region49
    $region48: #{tpu_custom_call.1} parent=1 // pred_region
      %693 = dma.done [#allocation4], 16
    $region49: #{tpu_custom_call.1} parent=1 // pred_fallthru
      _
    %694 = vsyncpa [#allocation3], 1
    %695 = vsyncpa [#allocation6], 1
    %696 = vsyncpa [#allocation9], 1
    %697 = vsyncpa [#allocation4], 1

</llo_original>
